<compile_context>
chip_gen: v7x
topology: tpu7x:2x2x1
jax: 0.10.0
libtpu: 0.0.40
codegen_flags: <defaults>
</compile_context>

<pallas_src>
import functools

import jax
import jax.numpy as jnp
from jax.experimental import pallas as pl
from jax.experimental.pallas import tpu as pltpu


# ---------------------------------------------------------------------------
# Kernels
# ---------------------------------------------------------------------------

def _unembed_kernel_acc(x_ref, w_ref, o_ref, acc_ref):
    """(tm, tk) @ (tk, tn) with f32 scratch accumulator (non-f32 output)."""
    @pl.when(pl.program_id(2) == 0)
    def _():
        acc_ref[...] = jnp.zeros_like(acc_ref)

    acc_ref[...] += jnp.dot(
        x_ref[...], w_ref[...], preferred_element_type=jnp.float32
    )

    @pl.when(pl.program_id(2) == pl.num_programs(2) - 1)
    def _():
        o_ref[...] = acc_ref[...].astype(o_ref.dtype)


def _unembed_kernel_f32(x_ref, w_ref, o_ref):
    """f32 output: accumulate directly into the resident output tile."""
    @pl.when(pl.program_id(2) == 0)
    def _():
        o_ref[...] = jnp.zeros_like(o_ref)

    o_ref[...] += jnp.dot(
        x_ref[...], w_ref[...], preferred_element_type=jnp.float32
    )


# ---------------------------------------------------------------------------
# Tile selection
# ---------------------------------------------------------------------------

def _round_up(v, n):
    return (v + n - 1) // n * n


def _divisors_x128(dim128, cap):
    """Multiples of 128 that exactly divide dim128 (a multiple of 128), descending."""
    q = dim128 // 128
    out = [128 * d for d in range(1, q + 1) if q % d == 0 and 128 * d <= cap]
    if not out:
        out = [128]
    return sorted(out, reverse=True)


# ~0.35 us per grid step, expressed as "equivalent HBM bytes" (~1 TB/s order).
_STEP_OVERHEAD_BYTES = 350_000


def _pick_tiles(m, k128, n128, x_b, w_b, out_b, needs_acc_scratch, budget, m_round):
    m_exact = _round_up(max(m, 1), m_round)
    if m_exact <= 512:
        tm_cands = [m_exact]                 # single M tile (decode / small M)
    else:
        tm_cands = [512, 256, 128]           # budget-driven, cap raised to 512

    tk_cands = _divisors_x128(k128, k128)    # full-K (collapse) tried first
    tn_cands = _divisors_x128(n128, 4096)    # lane-dense vocab tiles

    best = None
    for tm in tm_cands:
        m_pad = _round_up(m_exact, tm)
        grid_m = m_pad // tm
        for tk in tk_cands:
            grid_k = k128 // tk
            for tn in tn_cands:
                grid_n = n128 // tn
                vmem = (
                    2 * tm * tk * x_b        # x tile, double-buffered
                    + 2 * tk * tn * w_b      # W_U tile, double-buffered
                    + 2 * tm * tn * out_b    # output tile, double-buffered
                )
                if needs_acc_scratch:
                    vmem += tm * tn * 4      # f32 accumulator scratch
                if vmem > budget:
                    continue
                # HBM traffic (re-reads included) + per-grid-step overhead.
                cost = (
                    grid_n * m_pad * k128 * x_b
                    + grid_m * k128 * n128 * w_b
                    + m_pad * n128 * out_b
                    + grid_m * grid_n * grid_k * _STEP_OVERHEAD_BYTES
                )
                if best is None or cost < best[0]:
                    best = (cost, tm, tk, tn)

    if best is None:   # minimal tiles always fit any sane budget
        tm_fb = m_exact if m_exact <= 512 else 128
        return tm_fb, 128, 128
    _, tm, tk, tn = best

    # Megacore (v7x): keep >=2 tiles along N so the vocab — and hence the
    # W_U stream — is split across TensorCores rather than duplicated.
    if n128 // tn == 1 and tn >= 256 and (tn // 2) % 128 == 0:
        tn //= 2
    return tm, tk, tn


def _vmem_capacity_bytes():
    try:
        info = pltpu.get_tpu_info()
        cap = getattr(info, "vmem_capacity_bytes", None)
        if cap:
            return int(cap)
    except Exception:
        pass
    return 64 << 20   # conservative (v7x-sized) fallback; safe everywhere


# ---------------------------------------------------------------------------
# Wrapper
# ---------------------------------------------------------------------------

@functools.partial(jax.jit, static_argnames=("tm", "tn", "tk"))
def unembed(x, w_u, *, tm=None, tn=None, tk=None):
    """Unembed.forward: x @ W_U.  x: (..., d_model), W_U: (d_model, d_vocab)."""
    *lead, d_model = x.shape
    d_model_w, d_vocab = w_u.shape
    assert d_model == d_model_w, "x feature dim must match W_U's d_model"

    m = 1
    for s in lead:
        m *= s
    x2d = x.reshape(m, d_model)

    out_dtype = jnp.result_type(x.dtype, w_u.dtype)
    x_b = jnp.dtype(x.dtype).itemsize
    w_b = jnp.dtype(w_u.dtype).itemsize
    out_b = jnp.dtype(out_dtype).itemsize
    needs_acc_scratch = out_dtype != jnp.float32

    # Dtype-aware sublane rounding for the M axis (f32: 8, bf16: 16, int8/fp8: 32).
    m_round = {4: 8, 2: 16, 1: 32}.get(x_b, 8)

    # Per-generation VMEM: budget and vmem_limit derived from the same number.
    vmem_cap = _vmem_capacity_bytes()
    budget = min((vmem_cap * 70) // 100, 96 << 20)          # ~90 MiB v5e/v6e, ~45 MiB v7x
    vmem_limit = min(budget + (16 << 20), (vmem_cap * 90) // 100)

    # Pad K / N only to 128-granularity; tiles are exact divisors of the padded
    # dims.  K zero-padding keeps the reduction exact; the <=127 padded N
    # columns are sliced off the output.  For 128-aligned dims W_U is passed
    # straight through (no HBM copy).
    k128 = _round_up(d_model, 128)
    n128 = _round_up(d_vocab, 128)

    a_tm, a_tk, a_tn = _pick_tiles(
        m, k128, n128, x_b, w_b, out_b, needs_acc_scratch, budget, m_round
    )
    tm = a_tm if tm is None else tm
    tk = a_tk if tk is None else tk
    tn = a_tn if tn is None else tn

    m_pad = _round_up(max(m, 1), tm)
    if (m_pad, k128) != (m, d_model):
        x2d = jnp.pad(x2d, ((0, m_pad - m), (0, k128 - d_model)))
    w_p = w_u
    if (k128, n128) != (d_model, d_vocab):
        # TODO(synk): for non-128-aligned dims this still copies W_U once per
        # call; cache the 128-padded weight at the model level to avoid it.
        w_p = jnp.pad(w_u, ((0, k128 - d_model), (0, n128 - d_vocab)))

    grid_m, grid_n, grid_k = m_pad // tm, n128 // tn, k128 // tk

    cost = pl.CostEstimate(
        flops=2 * m_pad * k128 * n128,
        transcendentals=0,
        bytes_accessed=(
            grid_n * m_pad * k128 * x_b        # x re-read once per N tile
            + grid_m * k128 * n128 * w_b       # W_U re-read once per M tile
            + m_pad * n128 * out_b
        ),
    )

    kernel = _unembed_kernel_acc if needs_acc_scratch else _unembed_kernel_f32
    scratch = [pltpu.VMEM((tm, tn), jnp.float32)] if needs_acc_scratch else []

    out = pl.pallas_call(
        kernel,
        out_shape=jax.ShapeDtypeStruct((m_pad, n128), out_dtype),
        grid_spec=pltpu.PrefetchScalarGridSpec(
            num_scalar_prefetch=0,
            grid=(grid_m, grid_n, grid_k),
            in_specs=[
                pl.BlockSpec((tm, tk), lambda i, j, k: (i, k)),
                pl.BlockSpec((tk, tn), lambda i, j, k: (k, j)),
            ],
            out_specs=pl.BlockSpec((tm, tn), lambda i, j, k: (i, j)),
            scratch_shapes=scratch,
        ),
        compiler_params=pltpu.CompilerParams(
            dimension_semantics=("parallel", "parallel", "arbitrary"),
            vmem_limit_bytes=int(vmem_limit),
        ),
        cost_estimate=cost,
    )(x2d, w_p)

    out = out[:m, :d_vocab]
    return out.reshape(*lead, d_vocab)


if __name__ == "__main__":
    key = jax.random.PRNGKey(0)

    # Case 1: small shapes consistent with the module (batch=2, seq=8,
    # d_model=128, d_vocab=256) — zero-copy (no padding) path for W_U.
    batch, seq, d_model, d_vocab = 2, 8, 128, 256
    kx, kw, kx2, kw2 = jax.random.split(key, 4)
    x = jax.random.normal(kx, (batch, seq, d_model), dtype=jnp.float32)
    w_u = jax.random.normal(kw, (d_model, d_vocab), dtype=jnp.float32) / jnp.sqrt(
        jnp.float32(d_vocab)
    )
    out = jax.block_until_ready(unembed(x, w_u))
    ref = x @ w_u
    assert out.shape == (batch, seq, d_vocab)
    assert jnp.allclose(out, ref, atol=1e-4, rtol=1e-4)

    # Case 2: non-128-aligned dims (d_model=96, d_vocab=250) — exercises the
    # minimal to-128 padding path.
    d_model2, d_vocab2 = 96, 250
    x2 = jax.random.normal(kx2, (batch, seq, d_model2), dtype=jnp.float32)
    w_u2 = jax.random.normal(kw2, (d_model2, d_vocab2), dtype=jnp.float32) / jnp.sqrt(
        jnp.float32(d_vocab2)
    )
    out2 = jax.block_until_ready(unembed(x2, w_u2))
    ref2 = x2 @ w_u2
    assert out2.shape == (batch, seq, d_vocab2)
    assert jnp.allclose(out2, ref2, atol=1e-4, rtol=1e-4)

    print("KERNEL_OK")
</pallas_src>

<mosaic_0001>
module attributes {stable_mosaic.version = 11 : i64} {
  func.func @_unembed_kernel_f32(%arg0: i32, %arg1: i32, %arg2: i32, %arg3: memref<16x128xf32, #tpu.memory_space<vmem>>, %arg4: memref<128x128xf32, #tpu.memory_space<vmem>>, %arg5: memref<16x128xf32, #tpu.memory_space<vmem>>) attributes {dimension_semantics = [#tpu.dimension_semantics<parallel>, #tpu.dimension_semantics<parallel>, #tpu.dimension_semantics<arbitrary>], iteration_bounds = array<i64: 1, 2, 1>, scalar_prefetch = 0 : i64, scratch_operands = 0 : i64, tpu.core_type = #tpu.core_type<tc>, window_params = [{transform_indices = @transform_0, window_bounds = array<i64: 16, 128>}, {transform_indices = @transform_1, window_bounds = array<i64: 128, 128>}, {transform_indices = @transform_2, window_bounds = array<i64: 16, 128>}]} {
    %c0_i32 = arith.constant 0 : i32
    %0 = arith.cmpi eq, %arg2, %c0_i32 : i32
    %1 = arith.extui %0 : i1 to i32
    %c0_i32_0 = arith.constant 0 : i32
    %2 = arith.cmpi ne, %1, %c0_i32_0 : i32
    scf.if %2 {
      %cst_8 = arith.constant 0.000000e+00 : f32
      %9 = vector.broadcast %cst_8 : f32 to vector<16x128xf32>
      %c0_9 = arith.constant 0 : index
      %c0_10 = arith.constant 0 : index
      %10 = vector.load %arg5[%c0_9, %c0_10] : memref<16x128xf32, #tpu.memory_space<vmem>>, vector<16x128xf32>
      tpu.vector_store %arg5[%c0_9, %c0_10], %9 {strides = array<i32>} : memref<16x128xf32, #tpu.memory_space<vmem>>, vector<16x128xf32>,
    } else {
    }
    %c0 = arith.constant 0 : index
    %c0_1 = arith.constant 0 : index
    %3 = vector.load %arg5[%c0, %c0_1] : memref<16x128xf32, #tpu.memory_space<vmem>>, vector<16x128xf32>
    %c0_2 = arith.constant 0 : index
    %c0_3 = arith.constant 0 : index
    %4 = vector.load %arg3[%c0_2, %c0_3] : memref<16x128xf32, #tpu.memory_space<vmem>>, vector<16x128xf32>
    %c0_4 = arith.constant 0 : index
    %c0_5 = arith.constant 0 : index
    %5 = vector.load %arg4[%c0_4, %c0_5] : memref<128x128xf32, #tpu.memory_space<vmem>>, vector<128x128xf32>
    %cst = arith.constant dense<0.000000e+00> : vector<16x128xf32>
    %6 = tpu.matmul %4, %5, %cst {dimension_numbers = #tpu.dot_dimension_numbers<[1], [0], [0], [1], [0, 0, 1, 1], [], []>} : vector<16x128xf32>, vector<128x128xf32>, vector<16x128xf32> -> vector<16x128xf32>
    %7 = arith.addf %3, %6 : vector<16x128xf32>
    %c0_6 = arith.constant 0 : index
    %c0_7 = arith.constant 0 : index
    %8 = vector.load %arg5[%c0_6, %c0_7] : memref<16x128xf32, #tpu.memory_space<vmem>>, vector<16x128xf32>
    tpu.vector_store %arg5[%c0_6, %c0_7], %7 {strides = array<i32>} : memref<16x128xf32, #tpu.memory_space<vmem>>, vector<16x128xf32>,
    return
  }
  func.func @transform_0(%arg0: i32, %arg1: i32, %arg2: i32) -> (i32, i32) {
    %c0_i32 = arith.constant 0 : i32
    return %arg0, %arg2 : i32, i32
  }
  func.func @transform_1(%arg0: i32, %arg1: i32, %arg2: i32) -> (i32, i32) {
    %c0_i32 = arith.constant 0 : i32
    return %arg2, %arg1 : i32, i32
  }
  func.func @transform_2(%arg0: i32, %arg1: i32, %arg2: i32) -> (i32, i32) {
    %c0_i32 = arith.constant 0 : i32
    return %arg0, %arg1 : i32, i32
  }
}

</mosaic_0001>

<llo_original>
// kernel: unembed.1
$region0: #{unembed.1}
  #allocation0 [shape = 'u32[]', space=smem, size = 0x4, offset = 0x4, fixed_abs, tag = 'smem constant byte address 0x4 - core index']
  #allocation1 [shape = 'u32[144,128]{1,0:T(1,128)}', space=vmem, size = 0x12000, scoped, tag = 'internal scratch']
  %s0 = inlined_call_operand.hbm [shape: f32[16,128], index: 0, kind: input, shape index: {}]
  %s1 = inlined_call_operand.hbm [shape: f32[128,256], index: 1, kind: input, shape index: {}]
  %s2 = inlined_call_operand.hbm [shape: f32[16,256], index: 2, kind: output, shape index: {}]
  %s3 = sld [smem:[#allocation0]]
  $region53: #{unembed.1} parent=0
    _
  %s5 = ssub.s32 1, %s3
  %s6 = scalar_select 0, %s5, %s3
  $region1: #{unembed.1} parent=0
    #allocation2 [shape = 'u8[8192]{0}', space=vmem, size = 0x2000, scoped, tag = 'input window, operand 0, single buffered']
    #allocation3 [shape = 's32[2]{0}', space=sflag, size = 0x8, scoped, tag = 'scoped memory for unembed.1']
    #allocation4 [shape = 's32[2]{0}', space=sflag, size = 0x8, scoped, tag = 'scoped memory for unembed.1']
    #allocation5 [shape = 'u8[131072]{0}', space=vmem, size = 0x20000, scoped, tag = 'input window, operand 1']
    #allocation6 [shape = 's32[2]{0}', space=sflag, size = 0x8, scoped, tag = 'scoped memory for unembed.1']
    #allocation7 [shape = 'u8[16384]{0}', space=vmem, size = 0x4000, scoped, tag = 'output window, operand 0']
    %7 = vsyncpa [#allocation3], 0
    %8 = vsyncpa [#allocation6], 0
    %s9 = scalar_lea.sflag [#allocation6], 1
    %10 = vsyncpa %s9, 0
    %11 = vsyncpa [#allocation4], 0
    %s12 = scalar_lea.sflag [#allocation4], 1
    %13 = vsyncpa %s12, 0
    loop: start=0, step=1, limit=4
    $region2: #{unembed.1} parent=1 // loop_pre_header
      _
    $region3: #{unembed.1} parent=1 // loop_header
      %s15 = sphi 0, %s19
      %p16 = scmp.ge.s32.totalorder %s15, 4
      %s22 = sphi 0, %s41
      %s23 = sphi 0, %s37
      %s24 = sphi 0, %s33
      %s25 = sphi 0, %s22
      %s26 = sphi 0, %s23
      %s27 = sphi 0, %s24
      %s28 = sphi 0, %s25
      %s29 = sphi 0, %s26
      %s30 = sphi 0, %s27
      %s46 = sphi 0, %s48
      %s49 = sphi 0, %s46
      %s50 = sphi 0, %s49
      %s66 = sphi 0, %s50
      %s74 = sphi 0, %s76
      %s77 = sphi 0, %s74
      %s78 = sphi 0, %s77
      %s94 = sphi 0, %s78
      %s102 = sphi 0, %s104
      %s105 = sphi 0, %s102
      %s106 = sphi 0, %s105
      %s122 = sphi 0, %s106
    $region4: #{unembed.1} parent=1 // loop_header_branch
      %18 = sbr.rel (%p16) target = $region8
    $region5: #{unembed.1} parent=1 // loop_body
      %s20 = ssub.s32 %s15, 1
      %s21 = ssub.s32 %s15, 2
      %s31 = sadd.s32 1, %s24
      %p32 = scmp.ge.s32.totalorder %s31, 1
      %s33 = scalar_select %p32, 0, %s31
      %s34 = sadd.s32 1, %s23
      %s35 = scalar_select %p32, %s34, %s23
      %p36 = scmp.ge.s32.totalorder %s35, 2
      %s37 = scalar_select %p36, 0, %s35
      %s38 = sadd.s32 1, %s22
      %s39 = scalar_select %p36, %s38, %s22
      %p40 = scmp.ge.s32.totalorder %s39, 1
      %s41 = scalar_select %p40, 0, %s39
      %s42 = ssub.s32 %s22, %s41
      %s43 = ssub.s32 %s24, %s33
      %s44 = sor.u32 %s42, %s43
      %p45 = scmp.eq.s32.totalorder %s44, 0
      %s47 = sadd.s32 %s46, 1
      %s48 = scalar_select %p45, %s46, %s47
      %p51 = pneg %p45
      %p52 = scmp.eq.s32.totalorder %s15, 1
      %p53 = por %p51, %p52
      %p54 = scmp.ne.s32.totalorder %s46, %s49
      %p55 = scmp.eq.s32.totalorder %s15, 0
      %p56 = por %p54, %p55
      %p57 = scmp.ne.s32.totalorder %s46, %s49
      %p58 = scmp.eq.s32.totalorder %s20, 1
      %p59 = por %p57, %p58
      %p60 = scmp.ne.s32.totalorder %s49, %s50
      %p61 = scmp.eq.s32.totalorder %s20, 0
      %p62 = por %p60, %p61
      %p63 = scmp.ne.s32.totalorder %s49, %s50
      %p64 = scmp.eq.s32.totalorder %s21, 1
      %p65 = por %p63, %p64
      %p67 = scmp.ne.s32.totalorder %s50, %s66
      %p68 = scmp.eq.s32.totalorder %s21, 0
      %p69 = por %p67, %p68
      %s70 = ssub.s32 %s24, %s33
      %s71 = ssub.s32 %s23, %s37
      %s72 = sor.u32 %s70, %s71
      %p73 = scmp.eq.s32.totalorder %s72, 0
      %s75 = sadd.s32 %s74, 1
      %s76 = scalar_select %p73, %s74, %s75
      %p79 = pneg %p73
      %p80 = scmp.eq.s32.totalorder %s15, 1
      %p81 = por %p79, %p80
      %p82 = scmp.ne.s32.totalorder %s74, %s77
      %p83 = scmp.eq.s32.totalorder %s15, 0
      %p84 = por %p82, %p83
      %p85 = scmp.ne.s32.totalorder %s74, %s77
      %p86 = scmp.eq.s32.totalorder %s20, 1
      %p87 = por %p85, %p86
      %p88 = scmp.ne.s32.totalorder %s77, %s78
      %p89 = scmp.eq.s32.totalorder %s20, 0
      %p90 = por %p88, %p89
      %p91 = scmp.ne.s32.totalorder %s77, %s78
      %p92 = scmp.eq.s32.totalorder %s21, 1
      %p93 = por %p91, %p92
      %p95 = scmp.ne.s32.totalorder %s78, %s94
      %p96 = scmp.eq.s32.totalorder %s21, 0
      %p97 = por %p95, %p96
      %s98 = ssub.s32 %s22, %s41
      %s99 = ssub.s32 %s23, %s37
      %s100 = sor.u32 %s98, %s99
      %p101 = scmp.eq.s32.totalorder %s100, 0
      %s103 = sadd.s32 %s102, 1
      %s104 = scalar_select %p101, %s102, %s103
      %p107 = pneg %p101
      %p108 = scmp.eq.s32.totalorder %s15, 1
      %p109 = por %p107, %p108
      %p110 = scmp.ne.s32.totalorder %s102, %s105
      %p111 = scmp.eq.s32.totalorder %s15, 0
      %p112 = por %p110, %p111
      %p113 = scmp.ne.s32.totalorder %s102, %s105
      %p114 = scmp.eq.s32.totalorder %s20, 1
      %p115 = por %p113, %p114
      %p116 = scmp.ne.s32.totalorder %s105, %s106
      %p117 = scmp.eq.s32.totalorder %s20, 0
      %p118 = por %p116, %p117
      %p119 = scmp.ne.s32.totalorder %s105, %s106
      %p120 = scmp.eq.s32.totalorder %s21, 1
      %p121 = por %p119, %p120
      %p123 = scmp.ne.s32.totalorder %s106, %s122
      %p124 = scmp.eq.s32.totalorder %s21, 0
      %p125 = por %p123, %p124
      %p126 = scmp.le.s32.totalorder 1, %s15
      %p127 = scmp.lt.s32.totalorder %s15, 3
      %p128 = pnand %p126, %p127
      %p129 = pneg %p128
      // Predicated region
      $region9: #{unembed.1} parent=5 // pred_check
        _
      $region10: #{unembed.1} parent=5 // pred_check_branch
        %131 = sbr.rel (%p128) target = $region12
      $region11: #{unembed.1} parent=5 // pred_region
        %s132 = ssub.s32 %s15, 1
        // Predicated region
        $region13: #{unembed.1} parent=11 // pred_check
          %p133 = pneg %p62
        $region14: #{unembed.1} parent=11 // pred_check_branch
          %135 = sbr.rel (%p133) target = $region16
        $region15: #{unembed.1} parent=11 // pred_region
          %s136 = smul.u32 2, %s25
          %s138 = ssub.s32 256, 256
          %139 = vsyncadd [#allocation3], %s138
          %s140 = sadd.s32 %s27, %s136
          %s141 = smul.addr %s140, 128
          %s142 = scalar_lea.hbm %s0, %s141
          %s143 = sshll.u32 [#allocation2], 4
          %s144 = int_to_ptr.vmem [resolvable:$true] %s143
          %149 = dma.hbm_to_vmem [thread:$0]  %s142, 256, %s144, [#allocation3], 128, 128, 8
        $region16: #{unembed.1} parent=11 // pred_fallthru
          _
      $region12: #{unembed.1} parent=5 // pred_fallthru
        _
      %p150 = scmp.lt.s32.totalorder %s15, 2
      // Predicated region
      $region17: #{unembed.1} parent=5 // pred_check
        %p151 = pneg %p150
      $region18: #{unembed.1} parent=5 // pred_check_branch
        %153 = sbr.rel (%p151) target = $region20
      $region19: #{unembed.1} parent=5 // pred_region
        // Predicated region
        $region21: #{unembed.1} parent=19 // pred_check
          %p154 = pneg %p84
        $region22: #{unembed.1} parent=19 // pred_check_branch
          %156 = sbr.rel (%p154) target = $region24
        $region23: #{unembed.1} parent=19 // pred_region
          %s157 = sand.u32 %s74, 1
          %s158 = scalar_lea.sflag [#allocation6], %s157
          %s159 = sand.u32 %s74, 1
          %s160 = smul.addr %s159, 128
          %s161 = scalar_lea.vmem [#allocation5], %s160
          %s162 = smul.u32 16, %s24
          %s164 = ssub.s32 2048, 2048
          %165 = vsyncadd %s158, %s164
          %s166 = smul.addr %s162, 2
          %s167 = sadd.s32 %s23, %s166
          %s168 = smul.addr %s167, 128
          %s169 = scalar_lea.hbm %s1, %s168
          %s170 = sshll.u32 %s161, 4
          %s171 = int_to_ptr.vmem [resolvable:$true] %s170
          %176 = dma.hbm_to_vmem [thread:$0]  %s169, 2048, %s171, %s158, 256, 128, 8
        $region24: #{unembed.1} parent=19 // pred_fallthru
          _
      $region20: #{unembed.1} parent=5 // pred_fallthru
        _
      %p177 = scmp.le.s32.totalorder 1, %s15
      %p178 = scmp.lt.s32.totalorder %s15, 3
      %p179 = pnand %p177, %p178
      %p180 = pneg %p179
      // Predicated region
      $region25: #{unembed.1} parent=5 // pred_check
        _
      $region26: #{unembed.1} parent=5 // pred_check_branch
        %182 = sbr.rel (%p179) target = $region28
      $region27: #{unembed.1} parent=5 // pred_region
        %s183 = ssub.s32 %s15, 1
        // Predicated region
        $region29: #{unembed.1} parent=27 // pred_check
          %p184 = pneg %p62
        $region30: #{unembed.1} parent=27 // pred_check_branch
          %186 = sbr.rel (%p184) target = $region32
        $region31: #{unembed.1} parent=27 // pred_region
          %187 = dma.done [#allocation3], 256
        $region32: #{unembed.1} parent=27 // pred_fallthru
          _
        %s188 = sand.u32 %s77, 1
        %s189 = scalar_lea.sflag [#allocation6], %s188
        %s190 = sand.u32 %s77, 1
        %s191 = smul.addr %s190, 128
        %s192 = scalar_lea.vmem [#allocation5], %s191
        // Predicated region
        $region33: #{unembed.1} parent=27 // pred_check
          %p193 = pneg %p90
        $region34: #{unembed.1} parent=27 // pred_check_branch
          %195 = sbr.rel (%p193) target = $region36
        $region35: #{unembed.1} parent=27 // pred_region
          %196 = dma.done %s189, 2048
        $region36: #{unembed.1} parent=27 // pred_fallthru
          _
        %p197 = pneg %p62
        %p198 = pneg %p59
        %s199 = sand.u32 %s77, 1
        %s200 = scalar_lea.sflag [#allocation6], %s199
        %s201 = sand.u32 %s77, 1
        %s202 = smul.addr %s201, 128
        %s203 = scalar_lea.vmem [#allocation5], %s202
        %p204 = pneg %p90
        %p205 = pneg %p87
        %p206 = pneg %p118
        %p207 = pneg %p115
        %s208 = sand.u32 %s105, 1
        %s209 = scalar_lea.sflag [#allocation4], %s208
        %s210 = sand.u32 %s105, 1
        %s211 = smul.addr %s210, 16
        %s212 = scalar_lea.vmem [#allocation7], %s211
        %s213 = smul.u32 2, %s25
        %s214 = smul.u32 16, %s27
        %s215 = smul.u32 2, %s25
        %p216 = scmp.eq.s32.totalorder %s27, 0
        // Predicated region
        $region37: #{unembed.1} parent=27 // pred_check
          %p217 = pneg %p216
        $region38: #{unembed.1} parent=27 // pred_check_branch
          %219 = sbr.rel (%p217) target = $region40
        $region39: #{unembed.1} parent=27 // pred_region
          %220 = vst [vmem:[%s212] sm:$0xff] 0.0
          %221 = vst [vmem:[%s212 + $0x8] sm:$0xff] 0.0
        $region40: #{unembed.1} parent=27 // pred_fallthru
          _
        %v222 = vld [vmem:[%s212] sm:$0xff]
        %v223 = vld [vmem:[%s212 + $0x8] sm:$0xff]
        %v224 = vld [vmem:[#allocation2] sm:$0xff]
        %v225 = vld [vmem:[#allocation2 + $0x8] sm:$0xff]
        %v226 = vld [vmem:[%s192] sm:$0xff]
        %v227 = vld [vmem:[%s192 + $0x8] sm:$0xff]
        %v228 = vld [vmem:[%s192 + $0x10] sm:$0xff]
        %v229 = vld [vmem:[%s192 + $0x18] sm:$0xff]
        %v230 = vld [vmem:[%s192 + $0x20] sm:$0xff]
        %v231 = vld [vmem:[%s192 + $0x28] sm:$0xff]
        %v232 = vld [vmem:[%s192 + $0x30] sm:$0xff]
        %v233 = vld [vmem:[%s192 + $0x38] sm:$0xff]
        %v234 = vld [vmem:[%s192 + $0x40] sm:$0xff]
        %v235 = vld [vmem:[%s192 + $0x48] sm:$0xff]
        %v236 = vld [vmem:[%s192 + $0x50] sm:$0xff]
        %v237 = vld [vmem:[%s192 + $0x58] sm:$0xff]
        %v238 = vld [vmem:[%s192 + $0x60] sm:$0xff]
        %v239 = vld [vmem:[%s192 + $0x68] sm:$0xff]
        %v240 = vld [vmem:[%s192 + $0x70] sm:$0xff]
        %v241 = vld [vmem:[%s192 + $0x78] sm:$0xff]
        %242 = vmatprep.subr.mxu0 0.0
        %243 = vmatpush1.msra.mxu0 %v226
        %244 = vmatprep.subr.mxu0 0.0
        %245 = vmatpush1.msra.mxu0 %v227
        %246 = vmatprep.subr.mxu0 0.0
        %247 = vmatpush1.msra.mxu0 %v228
        %248 = vmatprep.subr.mxu0 0.0
        %249 = vmatpush1.msra.mxu0 %v229
        %250 = vmatprep.subr.mxu0 0.0
        %251 = vmatpush1.msra.mxu0 %v230
        %252 = vmatprep.subr.mxu0 0.0
        %253 = vmatpush1.msra.mxu0 %v231
        %254 = vmatprep.subr.mxu0 0.0
        %255 = vmatpush1.msra.mxu0 %v232
        %256 = vmatprep.subr.mxu0 0.0
        %257 = vmatpush1.msra.mxu0 %v233
        %258 = vmatprep.subr.mxu0 0.0
        %259 = vmatpush1.msra.mxu0 %v234
        %260 = vmatprep.subr.mxu0 0.0
        %261 = vmatpush1.msra.mxu0 %v235
        %262 = vmatprep.subr.mxu0 0.0
        %263 = vmatpush1.msra.mxu0 %v236
        %264 = vmatprep.subr.mxu0 0.0
        %265 = vmatpush1.msra.mxu0 %v237
        %266 = vmatprep.subr.mxu0 0.0
        %267 = vmatpush1.msra.mxu0 %v238
        %268 = vmatprep.subr.mxu0 0.0
        %269 = vmatpush1.msra.mxu0 %v239
        %270 = vmatprep.subr.mxu0 0.0
        %271 = vmatpush1.msra.mxu0 %v240
        %272 = vmatprep.subr.mxu0 0.0
        %273 = vmatpush1.msra.mxu0 %v241
        %274 = vmatprep.subr.mxu0 0.0
        %275 = vmatpush1.msra.mxu0 0.0
        %276 = vmatprep.subr.mxu0 0.0
        %277 = vmatpush1.msra.mxu0 0.0
        %278 = vmatprep.subr.mxu0 0.0
        %279 = vmatpush1.msra.mxu0 0.0
        %280 = vmatprep.subr.mxu0 0.0
        %281 = vmatpush1.msra.mxu0 0.0
        %282 = vmatprep.subr.mxu0 0.0
        %283 = vmatpush1.msra.mxu0 0.0
        %284 = vmatprep.subr.mxu0 0.0
        %285 = vmatpush1.msra.mxu0 0.0
        %286 = vmatprep.subr.mxu0 0.0
        %287 = vmatpush1.msra.mxu0 0.0
        %288 = vmatprep.subr.mxu0 0.0
        %289 = vmatpush1.msra.mxu0 0.0
        %290 = vmatprep.subr.mxu0 0.0
        %291 = vmatpush1.msra.mxu0 0.0
        %292 = vmatprep.subr.mxu0 0.0
        %293 = vmatpush1.msra.mxu0 0.0
        %294 = vmatprep.subr.mxu0 0.0
        %295 = vmatpush1.msra.mxu0 0.0
        %296 = vmatprep.subr.mxu0 0.0
        %297 = vmatpush1.msra.mxu0 0.0
        %298 = vmatprep.subr.mxu0 0.0
        %299 = vmatpush1.msra.mxu0 0.0
        %300 = vmatprep.subr.mxu0 0.0
        %301 = vmatpush1.msra.mxu0 0.0
        %302 = vmatprep.subr.mxu0 0.0
        %303 = vmatpush1.msra.mxu0 0.0
        %304 = vmatprep.subr.mxu0 0.0
        %305 = vmatpush1.msra.mxu0 0.0
        %306 = vmatprep.mubr.f32.mxu0 0.0
        %307 = vmatmul.mubr.f32.gmra.mrb[0].mxu0 %v224
        %v308 = vpop.f32.mrb[0].mxu0
        %v309 = vadd.f32 0.0, %v308
        %v310 = vpop.f32.mrb[0].mxu0
        %311 = vmatprep.mubr.f32.mxu0 0.0
        %312 = vmatmul.mubr.f32.gmra.mrb[0].mxu0 %v225
        %v313 = vpop.f32.mrb[0].mxu0
        %v314 = vadd.f32 0.0, %v313
        %v315 = vpop.f32.mrb[0].mxu0
        %316 = vdwg.mxu0
        %v317 = vadd.f32 %v222, %v309
        %v318 = vadd.f32 %v223, %v314
        %319 = vst [vmem:[%s212] sm:$0xff] %v317
        %320 = vst [vmem:[%s212 + $0x8] sm:$0xff] %v318
        %s321 = sand.u32 %s105, 1
        %s322 = scalar_lea.sflag [#allocation4], %s321
        %s323 = sand.u32 %s105, 1
        %s324 = smul.addr %s323, 16
        %s325 = scalar_lea.vmem [#allocation7], %s324
        // Predicated region
        $region41: #{unembed.1} parent=27 // pred_check
          %p326 = pneg %p115
        $region42: #{unembed.1} parent=27 // pred_check_branch
          %328 = sbr.rel (%p326) target = $region44
        $region43: #{unembed.1} parent=27 // pred_region
          %s329 = smul.u32 2, %s25
          %s331 = ssub.s32 256, 256
          %332 = vsyncadd %s322, %s331
          %s333 = smul.addr %s329, 2
          %s334 = sadd.s32 %s26, %s333
          %s335 = smul.addr %s334, 128
          %s336 = scalar_lea.hbm %s2, %s335
          %s337 = sshll.u32 %s325, 4
          %s338 = int_to_ptr.vmem [resolvable:$true] %s337
          %343 = dma.vmem_to_hbm [thread:$0]  %s338, 256, %s336, %s322, 128, 256, 8
        $region44: #{unembed.1} parent=27 // pred_fallthru
          _
      $region28: #{unembed.1} parent=5 // pred_fallthru
        _
      %p344 = scmp.le.s32.totalorder 2, %s15
      // Predicated region
      $region45: #{unembed.1} parent=5 // pred_check
        %p345 = pneg %p344
      $region46: #{unembed.1} parent=5 // pred_check_branch
        %347 = sbr.rel (%p345) target = $region48
      $region47: #{unembed.1} parent=5 // pred_region
        %s348 = ssub.s32 %s15, 2
        // Predicated region
        $region49: #{unembed.1} parent=47 // pred_check
          %p349 = pneg %p121
        $region50: #{unembed.1} parent=47 // pred_check_branch
          %351 = sbr.rel (%p349) target = $region52
        $region51: #{unembed.1} parent=47 // pred_region
          %s352 = sand.u32 %s106, 1
          %s353 = scalar_lea.sflag [#allocation4], %s352
          %s354 = sand.u32 %s106, 1
          %s355 = smul.addr %s354, 16
          %s356 = scalar_lea.vmem [#allocation7], %s355
          %357 = dma.done %s353, 256
        $region52: #{unembed.1} parent=47 // pred_fallthru
          _
      $region48: #{unembed.1} parent=5 // pred_fallthru
        _
    $region6: #{unembed.1} parent=1 // loop_footer
      %s19 = sadd.s32 1, %s15
    $region7: #{unembed.1} parent=1 // loop_footer_branch
      %14 = sbr.rel target = $region3
    $region8: #{unembed.1} parent=1 // loop_exit
      _
    %358 = vsyncpa [#allocation3], 1
    %s359 = scalar_lea.sflag [#allocation3], 1
    %360 = vsyncpa %s359, 1
    %361 = vsyncpa [#allocation6], 1
    %s362 = scalar_lea.sflag [#allocation6], 1
    %363 = vsyncpa %s362, 1
    %364 = vsyncpa [#allocation4], 1
    %s365 = scalar_lea.sflag [#allocation4], 1
    %366 = vsyncpa %s365, 1

</llo_original>
